<compile_context>
chip_gen: v7x
topology: tpu7x:2x2x1
jax: 0.10.0
libtpu: 0.0.40
codegen_flags: <defaults>
</compile_context>

<pallas_src>
import functools

import jax
import jax.numpy as jnp
from jax.experimental import pallas as pl
from jax.experimental.pallas import tpu as pltpu


def _round_up(x, m):
    return (x + m - 1) // m * m


def _cdiv(a, b):
    return (a + b - 1) // b


@functools.lru_cache(maxsize=None)
def _vmem_budgets():
    """(per-x-block budget, base vmem limit, vmem limit cap) per generation."""
    try:
        cap = int(getattr(pltpu.get_tpu_info(), "vmem_capacity_bytes", 0))
    except Exception:
        cap = 0
    if cap >= 96 * 1024 * 1024:
        # v5e / v6e: 128 MiB VMEM -> keep large blocks (fewer per-step overheads).
        return 12 * 1024 * 1024, 64 * 1024 * 1024, 100 * 1024 * 1024
    # v7x (64 MiB VMEM) or unknown: conservative blocks + headroom for buffering.
    return 7 * 1024 * 1024, 40 * 1024 * 1024, 56 * 1024 * 1024


def _dense(a, w, b):
    """(Bt, K) f32 @ (K, N) + (1, N).  VPU path for tiny K/N, MXU otherwise."""
    K, N = w.shape
    w = w.astype(jnp.float32)
    b = b.astype(jnp.float32)
    if max(K, N) <= 32:
        # Tiny SE bottleneck: broadcast-mul + sublane reduce on VPU/XLU keeps
        # MXU push/pop latency off the serial pool -> gate -> sum chain.
        y = jnp.sum(a[:, :, None] * w[None, :, :], axis=1)
    else:
        y = jnp.dot(a, w, preferred_element_type=jnp.float32)
    return y + b


def _se_kernel(x_ref, w1t_ref, b1_ref, w2t_ref, b2_ref, wc_ref, bc_ref,
               o_ref, *, inv_hw, c_chunk):
    """One grid step: a (Bt, C, HW) slab of the batch -> (Bt, HW) output."""
    Bt, C, HW = x_ref.shape

    # Static chunk plan over C: bounds the f32 temporaries to c_chunk sublanes
    # instead of a full (Bt, C, HW) slab.
    bounds = []
    start = 0
    while start < C:
        size = min(c_chunk, C - start)
        bounds.append((start, size))
        start += size

    # ---- AdaptiveAvgPool2d(1): lane-axis sum, chunked over C ----
    parts = []
    for (cs, cl) in bounds:
        xc = x_ref[:, cs:cs + cl, :].astype(jnp.float32)        # (Bt, cl, HW)
        parts.append(jnp.sum(xc, axis=-1))                      # (Bt, cl)
    pooled = parts[0] if len(parts) == 1 else jnp.concatenate(parts, axis=1)
    pooled = pooled * inv_hw                                    # (Bt, C)

    # ---- fc1 + ReLU -> fc2 + sigmoid (weights pre-transposed in wrapper) ----
    h = jnp.maximum(_dense(pooled, w1t_ref[...], b1_ref[...]), 0.0)
    gate = jax.nn.sigmoid(_dense(h, w2t_ref[...], b2_ref[...]))  # (Bt, C)

    # ---- fold the 1x1-conv weight into the gate: out = sum_c w_eff*x ----
    w_eff = gate * wc_ref[...].astype(jnp.float32)              # (Bt, C)

    # ---- weighted channel sum, chunked over C (VPU mul + sublane reduce) ----
    acc = jnp.zeros((Bt, HW), jnp.float32)
    for (cs, cl) in bounds:
        xc = x_ref[:, cs:cs + cl, :].astype(jnp.float32)        # (Bt, cl, HW)
        wce = w_eff[:, cs:cs + cl]                               # (Bt, cl)
        acc = acc + jnp.sum(wce[:, :, None] * xc, axis=1)       # (Bt, HW)

    o_ref[...] = (acc + bc_ref[0]).astype(o_ref.dtype)


@jax.jit
def se_block_pallas(x, w1, b1, w2, b2, wc, bc):
    """x: (B, C, H, W). Returns (B, 1, H, W) matching PyTorch SEBlock.forward."""
    B, C, H, W = x.shape
    HW = H * W
    Cmid = w1.shape[0]

    x_flat = x.reshape(B, C, HW)           # view only; no HBM padding copies

    # ---- VMEM footprint of one image's slab (with (8,128) tile padding) ----
    itemsize = x.dtype.itemsize
    sub = {4: 8, 2: 16, 1: 32}.get(itemsize, 8)
    per_image_bytes = _round_up(C, sub) * _round_up(HW, 128) * itemsize

    budget, base_limit, limit_cap = _vmem_budgets()

    # ---- batch tile: fit the VMEM budget AND keep >= 4 grid steps when the
    # batch allows (pipelined DMA overlap; dual-TC sharding on v7x) ----
    if B <= 4:
        Bt = B                              # tiny batch: few steps unavoidable
    else:
        Bt = min(max(1, budget // per_image_bytes), _cdiv(B, 4))
        Bt = (Bt // 8) * 8                  # output block rows need 8-sublane align
        if Bt == 0:
            # Budget asks for < 8 images but the sublane constraint forces 8.
            # TODO(synk): if a single image exceeds ~budget/8 (huge C*HW), split
            # HW into an inner pipelined loop (pltpu.emit_pipeline, x in pl.ANY)
            # or two pallas_calls (pool, then gate+weighted-sum) to bound VMEM.
            Bt = min(8, B)
        if Bt >= B:
            Bt = B
    grid = _cdiv(B, Bt)                     # last block is masked, never padded

    # vmem limit: double-buffered x blocks + chunked f32 temps + headroom.
    block_bytes = Bt * per_image_bytes
    vmem_limit = int(min(limit_cap, max(base_limit, 3 * block_bytes + (4 << 20))))

    # ---- chunk size over C: at most ~16 chunks, multiple of the sublane count
    c_chunk = max(1, _cdiv(_cdiv(C, sub), 16)) * sub

    # ---- pre-layout the tiny parameters (no in-kernel transposes) ----
    w1t = w1.T                              # (C, Cmid)
    w2t = w2.T                              # (Cmid, C)
    b1_2d = b1.reshape(1, Cmid)
    b2_2d = b2.reshape(1, C)
    wc_2d = wc.reshape(1, C)                # conv weight (1, C, 1, 1) -> (1, C)
    bc_1d = bc.reshape(1)                   # conv bias scalar -> SMEM

    kernel = functools.partial(_se_kernel, inv_hw=1.0 / HW, c_chunk=c_chunk)

    out_flat = pl.pallas_call(
        kernel,
        out_shape=jax.ShapeDtypeStruct((B, HW), x.dtype),
        grid_spec=pltpu.PrefetchScalarGridSpec(
            num_scalar_prefetch=0,
            grid=(grid,),
            in_specs=[
                # x slab: last two block dims are full-extent (C, HW), so no
                # (8,128) divisibility requirement and no HBM padding copy.
                pl.BlockSpec((Bt, C, HW), lambda b: (b, 0, 0)),
                pl.BlockSpec((C, Cmid), lambda b: (0, 0)),          # fc1 W^T
                pl.BlockSpec((1, Cmid), lambda b: (0, 0)),          # fc1 bias
                pl.BlockSpec((Cmid, C), lambda b: (0, 0)),          # fc2 W^T
                pl.BlockSpec((1, C), lambda b: (0, 0)),             # fc2 bias
                pl.BlockSpec((1, C), lambda b: (0, 0)),             # conv weight
                pl.BlockSpec(memory_space=pltpu.MemorySpace.SMEM),  # conv bias
            ],
            out_specs=pl.BlockSpec((Bt, HW), lambda b: (b, 0)),     # lane-dense
        ),
        compiler_params=pltpu.CompilerParams(
            dimension_semantics=("parallel",),   # batch tiles shard across TCs
            vmem_limit_bytes=vmem_limit,
        ),
    )(x_flat, w1t, b1_2d, w2t, b2_2d, wc_2d, bc_1d)

    return out_flat.reshape(B, 1, H, W)


def _reference(x, w1, b1, w2, b2, wc, bc):
    """Pure-JAX reference of the PyTorch forward for sanity checking."""
    B, C, H, W = x.shape
    s = jnp.mean(x, axis=(2, 3))                       # (B, C)
    h = jnp.maximum(s @ w1.T + b1, 0.0)                # (B, Cmid)
    g = jax.nn.sigmoid(h @ w2.T + b2)                  # (B, C)
    scaled = x * g[:, :, None, None]                   # (B, C, H, W)
    out = jnp.einsum("bchw,oc->bohw", scaled, wc.reshape(1, C)) \
        + bc.reshape(1, 1, 1, 1)
    return out


if __name__ == "__main__":
    key = jax.random.PRNGKey(0)
    B, C, H, W = 2, 4, 16, 16
    reduction_ratio = 1
    Cmid = C // reduction_ratio

    k = jax.random.split(key, 8)
    x = jax.random.normal(k[0], (B, C, H, W), dtype=jnp.float32)

    # Deterministic synthetic parameters (shapes match nn.Linear / nn.Conv2d).
    w1 = jax.random.normal(k[1], (Cmid, C), dtype=jnp.float32) * 0.3
    b1 = jax.random.normal(k[2], (Cmid,), dtype=jnp.float32) * 0.1
    w2 = jax.random.normal(k[3], (C, Cmid), dtype=jnp.float32) * 0.3
    b2 = jax.random.normal(k[4], (C,), dtype=jnp.float32) * 0.1
    wc = jax.random.normal(k[5], (1, C, 1, 1), dtype=jnp.float32) * 0.3
    bc = jax.random.normal(k[6], (1,), dtype=jnp.float32) * 0.1

    out = jax.block_until_ready(se_block_pallas(x, w1, b1, w2, b2, wc, bc))

    ref = _reference(x, w1, b1, w2, b2, wc, bc)
    assert out.shape == (B, 1, H, W), out.shape
    err = float(jnp.max(jnp.abs(out - ref)))
    assert err < 1e-4, f"max abs err {err}"

    print("KERNEL_OK")
</pallas_src>

<mosaic_0001>
module attributes {stable_mosaic.version = 11 : i64} {
  func.func @_se_kernel(%arg0: i32, %arg1: memref<2x4x256xf32, #tpu.memory_space<vmem>>, %arg2: memref<4x4xf32, #tpu.memory_space<vmem>>, %arg3: memref<1x4xf32, #tpu.memory_space<vmem>>, %arg4: memref<4x4xf32, #tpu.memory_space<vmem>>, %arg5: memref<1x4xf32, #tpu.memory_space<vmem>>, %arg6: memref<1x4xf32, #tpu.memory_space<vmem>>, %arg7: memref<1xf32, #tpu.memory_space<smem>>, %arg8: memref<2x256xf32, #tpu.memory_space<vmem>>) attributes {dimension_semantics = [#tpu.dimension_semantics<parallel>], iteration_bounds = array<i64: 1>, scalar_prefetch = 0 : i64, scratch_operands = 0 : i64, tpu.core_type = #tpu.core_type<tc>, window_params = [{transform_indices = @transform_0, window_bounds = array<i64: 2, 4, 256>}, {pipeline_mode = #tpu.pipeline_mode<synchronous>, transform_indices = @transform_1, window_bounds = array<i64: 4, 4>}, {pipeline_mode = #tpu.pipeline_mode<synchronous>, transform_indices = @transform_2, window_bounds = array<i64: 1, 4>}, {pipeline_mode = #tpu.pipeline_mode<synchronous>, transform_indices = @transform_3, window_bounds = array<i64: 4, 4>}, {pipeline_mode = #tpu.pipeline_mode<synchronous>, transform_indices = @transform_4, window_bounds = array<i64: 1, 4>}, {pipeline_mode = #tpu.pipeline_mode<synchronous>, transform_indices = @transform_5, window_bounds = array<i64: 1, 4>}, {transform_indices = @transform_6, window_bounds = array<i64: 1>}, {transform_indices = @transform_7, window_bounds = array<i64: 2, 256>}]} {
    %c0 = arith.constant 0 : index
    %c0_0 = arith.constant 0 : index
    %c0_1 = arith.constant 0 : index
    %0 = vector.load %arg1[%c0, %c0_0, %c0_1] : memref<2x4x256xf32, #tpu.memory_space<vmem>>, vector<2x4x256xf32>
    %cst = arith.constant dense<0.000000e+00> : vector<2x4xf32>
    %1 = vector.multi_reduction <add>, %0, %cst [2] : vector<2x4x256xf32> to vector<2x4xf32>
    %cst_2 = arith.constant 3.906250e-03 : f32
    %2 = vector.broadcast %cst_2 : f32 to vector<2x4xf32>
    %3 = arith.mulf %1, %2 : vector<2x4xf32>
    %c0_3 = arith.constant 0 : index
    %c0_4 = arith.constant 0 : index
    %4 = vector.load %arg2[%c0_3, %c0_4] : memref<4x4xf32, #tpu.memory_space<vmem>>, vector<4x4xf32>
    %c0_5 = arith.constant 0 : index
    %c0_6 = arith.constant 0 : index
    %5 = vector.load %arg3[%c0_5, %c0_6] : memref<1x4xf32, #tpu.memory_space<vmem>>, vector<1x4xf32>
    %6 = vector.shape_cast %3 : vector<2x4xf32> to vector<2x4x1xf32>
    %7 = vector.shape_cast %4 : vector<4x4xf32> to vector<1x4x4xf32>
    %8 = vector.broadcast %6 : vector<2x4x1xf32> to vector<2x4x4xf32>
    %9 = vector.broadcast %7 : vector<1x4x4xf32> to vector<2x4x4xf32>
    %10 = arith.mulf %8, %9 : vector<2x4x4xf32>
    %cst_7 = arith.constant dense<0.000000e+00> : vector<2x4xf32>
    %11 = vector.multi_reduction <add>, %10, %cst_7 [1] : vector<2x4x4xf32> to vector<2x4xf32>
    %12 = vector.broadcast %5 : vector<1x4xf32> to vector<2x4xf32>
    %13 = arith.addf %11, %12 : vector<2x4xf32>
    %cst_8 = arith.constant 0.000000e+00 : f32
    %14 = vector.broadcast %cst_8 : f32 to vector<2x4xf32>
    %15 = arith.maximumf %13, %14 : vector<2x4xf32>
    %c0_9 = arith.constant 0 : index
    %c0_10 = arith.constant 0 : index
    %16 = vector.load %arg4[%c0_9, %c0_10] : memref<4x4xf32, #tpu.memory_space<vmem>>, vector<4x4xf32>
    %c0_11 = arith.constant 0 : index
    %c0_12 = arith.constant 0 : index
    %17 = vector.load %arg5[%c0_11, %c0_12] : memref<1x4xf32, #tpu.memory_space<vmem>>, vector<1x4xf32>
    %18 = vector.shape_cast %15 : vector<2x4xf32> to vector<2x4x1xf32>
    %19 = vector.shape_cast %16 : vector<4x4xf32> to vector<1x4x4xf32>
    %20 = vector.broadcast %18 : vector<2x4x1xf32> to vector<2x4x4xf32>
    %21 = vector.broadcast %19 : vector<1x4x4xf32> to vector<2x4x4xf32>
    %22 = arith.mulf %20, %21 : vector<2x4x4xf32>
    %cst_13 = arith.constant dense<0.000000e+00> : vector<2x4xf32>
    %23 = vector.multi_reduction <add>, %22, %cst_13 [1] : vector<2x4x4xf32> to vector<2x4xf32>
    %24 = vector.broadcast %17 : vector<1x4xf32> to vector<2x4xf32>
    %25 = arith.addf %23, %24 : vector<2x4xf32>
    %26 = arith.negf %25 : vector<2x4xf32>
    %27 = math.exp %26 : vector<2x4xf32>
    %cst_14 = arith.constant 1.000000e+00 : f32
    %28 = vector.broadcast %cst_14 : f32 to vector<2x4xf32>
    %29 = arith.addf %28, %27 : vector<2x4xf32>
    %30 = arith.divf %28, %29 : vector<2x4xf32>
    %c0_15 = arith.constant 0 : index
    %c0_16 = arith.constant 0 : index
    %31 = vector.load %arg6[%c0_15, %c0_16] : memref<1x4xf32, #tpu.memory_space<vmem>>, vector<1x4xf32>
    %32 = vector.broadcast %31 : vector<1x4xf32> to vector<2x4xf32>
    %33 = arith.mulf %30, %32 : vector<2x4xf32>
    %cst_17 = arith.constant 0.000000e+00 : f32
    %34 = vector.broadcast %cst_17 : f32 to vector<2x256xf32>
    %c0_18 = arith.constant 0 : index
    %c0_19 = arith.constant 0 : index
    %c0_20 = arith.constant 0 : index
    %35 = vector.load %arg1[%c0_18, %c0_19, %c0_20] : memref<2x4x256xf32, #tpu.memory_space<vmem>>, vector<2x4x256xf32>
    %36 = vector.shape_cast %33 : vector<2x4xf32> to vector<2x4x1xf32>
    %37 = vector.broadcast %36 : vector<2x4x1xf32> to vector<2x4x256xf32>
    %38 = arith.mulf %37, %35 : vector<2x4x256xf32>
    %cst_21 = arith.constant dense<0.000000e+00> : vector<2x256xf32>
    %39 = vector.multi_reduction <add>, %38, %cst_21 [1] : vector<2x4x256xf32> to vector<2x256xf32>
    %40 = arith.addf %34, %39 : vector<2x256xf32>
    %c0_22 = arith.constant 0 : index
    %41 = memref.load %arg7[%c0_22] : memref<1xf32, #tpu.memory_space<smem>>
    %42 = vector.broadcast %41 : f32 to vector<2x256xf32>
    %43 = arith.addf %40, %42 : vector<2x256xf32>
    %c0_23 = arith.constant 0 : index
    %c0_24 = arith.constant 0 : index
    %44 = vector.load %arg8[%c0_23, %c0_24] : memref<2x256xf32, #tpu.memory_space<vmem>>, vector<2x256xf32>
    tpu.vector_store %arg8[%c0_23, %c0_24], %43 {strides = array<i32>} : memref<2x256xf32, #tpu.memory_space<vmem>>, vector<2x256xf32>,
    return
  }
  func.func @transform_0(%arg0: i32) -> (i32, i32, i32) {
    %c0_i32 = arith.constant 0 : i32
    %c0_i32_0 = arith.constant 0 : i32
    %c0_i32_1 = arith.constant 0 : i32
    return %arg0, %c0_i32, %c0_i32_0 : i32, i32, i32
  }
  func.func @transform_1(%arg0: i32) -> (i32, i32) {
    %c0_i32 = arith.constant 0 : i32
    %c0_i32_0 = arith.constant 0 : i32
    %c0_i32_1 = arith.constant 0 : i32
    return %c0_i32, %c0_i32_0 : i32, i32
  }
  func.func @transform_2(%arg0: i32) -> (i32, i32) {
    %c0_i32 = arith.constant 0 : i32
    %c0_i32_0 = arith.constant 0 : i32
    %c0_i32_1 = arith.constant 0 : i32
    return %c0_i32, %c0_i32_0 : i32, i32
  }
  func.func @transform_3(%arg0: i32) -> (i32, i32) {
    %c0_i32 = arith.constant 0 : i32
    %c0_i32_0 = arith.constant 0 : i32
    %c0_i32_1 = arith.constant 0 : i32
    return %c0_i32, %c0_i32_0 : i32, i32
  }
  func.func @transform_4(%arg0: i32) -> (i32, i32) {
    %c0_i32 = arith.constant 0 : i32
    %c0_i32_0 = arith.constant 0 : i32
    %c0_i32_1 = arith.constant 0 : i32
    return %c0_i32, %c0_i32_0 : i32, i32
  }
  func.func @transform_5(%arg0: i32) -> (i32, i32) {
    %c0_i32 = arith.constant 0 : i32
    %c0_i32_0 = arith.constant 0 : i32
    %c0_i32_1 = arith.constant 0 : i32
    return %c0_i32, %c0_i32_0 : i32, i32
  }
  func.func @transform_6(%arg0: i32) -> i32 {
    %c0_i32 = arith.constant 0 : i32
    %c0_i32_0 = arith.constant 0 : i32
    return %c0_i32 : i32
  }
  func.func @transform_7(%arg0: i32) -> (i32, i32) {
    %c0_i32 = arith.constant 0 : i32
    %c0_i32_0 = arith.constant 0 : i32
    return %arg0, %c0_i32 : i32, i32
  }
}

</mosaic_0001>

<llo_original>
// kernel: se_block_pallas.1
$region0: #{se_block_pallas.1}
  #allocation0 [shape = 'u32[]', space=smem, size = 0x4, offset = 0x4, fixed_abs, tag = 'smem constant byte address 0x4 - core index']
  #allocation1 [shape = 'u32[144,128]{1,0:T(1,128)}', space=vmem, size = 0x12000, scoped, tag = 'internal scratch']
  #allocation2 [shape = 'f32[1]{0:T(128)S(6)}', space=smem, size = 0x200, scoped, tag = 'scoped memory for se_block_pallas.1']
  %s0 = inlined_call_operand.vmem [shape: f32[2,4,256], index: 0, kind: input, shape index: {}]
  %s1 = inlined_call_operand.vmem [shape: f32[4,4], index: 1, kind: input, shape index: {}]
  %s2 = inlined_call_operand.vmem [shape: f32[1,4], index: 2, kind: input, shape index: {}]
  %s3 = inlined_call_operand.vmem [shape: f32[4,4], index: 3, kind: input, shape index: {}]
  %s4 = inlined_call_operand.vmem [shape: f32[1,4], index: 4, kind: input, shape index: {}]
  %s5 = inlined_call_operand.vmem [shape: f32[1,4], index: 5, kind: input, shape index: {}]
  %s6 = inlined_call_operand.<no memory space> [shape: f32[1], index: 6, kind: input, shape index: {}]
  %s7 = inlined_call_operand.vmem [shape: f32[2,256], index: 7, kind: output, shape index: {}]
  %s8 = sld [smem:[#allocation0]]
  $region38: #{se_block_pallas.1} parent=0
    _
  %s10 = ssub.s32 1, %s8
  %s11 = scalar_select 0, %s10, %s8
  %12 = sst [smem:[#allocation2]] %s6
  // Predicated region
  $region2: #{se_block_pallas.1} parent=0 // pred_check
    _
  $region3: #{se_block_pallas.1} parent=0 // pred_check_branch
    %14 = sbr.rel (0) target = $region5
  $region4: #{se_block_pallas.1} parent=0 // pred_region
    _
  $region5: #{se_block_pallas.1} parent=0 // pred_fallthru
    _
  // Predicated region
  $region6: #{se_block_pallas.1} parent=0 // pred_check
    _
  $region7: #{se_block_pallas.1} parent=0 // pred_check_branch
    %16 = sbr.rel (0) target = $region9
  $region8: #{se_block_pallas.1} parent=0 // pred_region
    _
  $region9: #{se_block_pallas.1} parent=0 // pred_fallthru
    _
  // Predicated region
  $region10: #{se_block_pallas.1} parent=0 // pred_check
    _
  $region11: #{se_block_pallas.1} parent=0 // pred_check_branch
    %18 = sbr.rel (0) target = $region13
  $region12: #{se_block_pallas.1} parent=0 // pred_region
    _
  $region13: #{se_block_pallas.1} parent=0 // pred_fallthru
    _
  // Predicated region
  $region14: #{se_block_pallas.1} parent=0 // pred_check
    _
  $region15: #{se_block_pallas.1} parent=0 // pred_check_branch
    %20 = sbr.rel (0) target = $region17
  $region16: #{se_block_pallas.1} parent=0 // pred_region
    _
  $region17: #{se_block_pallas.1} parent=0 // pred_fallthru
    _
  // Predicated region
  $region18: #{se_block_pallas.1} parent=0 // pred_check
    _
  $region19: #{se_block_pallas.1} parent=0 // pred_check_branch
    %22 = sbr.rel (0) target = $region21
  $region20: #{se_block_pallas.1} parent=0 // pred_region
    _
  $region21: #{se_block_pallas.1} parent=0 // pred_fallthru
    _
  // Predicated region
  $region22: #{se_block_pallas.1} parent=0 // pred_check
    _
  $region23: #{se_block_pallas.1} parent=0 // pred_check_branch
    %24 = sbr.rel (0) target = $region25
  $region24: #{se_block_pallas.1} parent=0 // pred_region
    _
  $region25: #{se_block_pallas.1} parent=0 // pred_fallthru
    _
  // Predicated region
  $region26: #{se_block_pallas.1} parent=0 // pred_check
    _
  $region27: #{se_block_pallas.1} parent=0 // pred_check_branch
    %26 = sbr.rel (0) target = $region29
  $region28: #{se_block_pallas.1} parent=0 // pred_region
    _
  $region29: #{se_block_pallas.1} parent=0 // pred_fallthru
    _
  %v27 = vld [vmem:[%s0] sm:$0xff]
  %v28 = vld [vmem:[%s0 + $0x8] sm:$0xff]
  %v31 = vcombine.high %v27, %v27
  %v32 = vcombine.high %v28, %v28
  %vm35 = vcmask 1043456
  %v36 = vsel %vm35, %v27, 0.0
  %v37 = vsel %vm35, %v31, 0.0
  %v38 = vadd.f32 %v36, %v37
  %39 = vadd.xlane.f32.xlu0 %v38
  %v40 = vpop.xlane.xlu0 %39
  %v41 = vsel %vm35, %v28, 0.0
  %v42 = vsel %vm35, %v32, 0.0
  %v43 = vadd.f32 %v41, %v42
  %44 = vadd.xlane.f32.xlu0 %v43
  %v45 = vpop.xlane.xlu0 %44
  %v46 = vmul.f32 %v40, 0.00390625
  %v47 = vmul.f32 %v45, 0.00390625
  %v48 = vld [vmem:[%s1] sm:$0xf]
  %v49 = vld [vmem:[%s2] sm:$0x1]
  %v50 = vmul.f32 %v46, %v48
  %v51 = vmul.f32 %v47, %v48
  %vm52 = vcmask 27648
  %v53 = vsel %vm52, %v50, 0.0
  %v54 = vrot.slane %v53, 4
  %v55 = vadd.f32 %v53, %v54
  %v56 = vrot.slane %v55, 2
  %v57 = vadd.f32 %v55, %v56
  %v58 = vrot.slane %v57, 1
  %v59 = vadd.f32 %v57, %v58
  %v60 = vsel %vm52, %v51, 0.0
  %v61 = vrot.slane %v60, 4
  %v62 = vadd.f32 %v60, %v61
  %v63 = vrot.slane %v62, 2
  %v64 = vadd.f32 %v62, %v63
  %v65 = vrot.slane %v64, 1
  %v66 = vadd.f32 %v64, %v65
  %v68 = vlaneseq
  %v69 = vshrl.u32 %v68, 7
  %v70 = vsub.s32 0, %v69
  %v71 = vrot.slane %v49, %v70
  %v73 = vadd.f32 %v59, %v71
  %v74 = vadd.f32 %v66, %v71
  %v75 = vmax.f32 %v73, 0.0
  %v76 = vmax.f32 %v74, 0.0
  %v77 = vld [vmem:[%s3] sm:$0xf]
  %v78 = vld [vmem:[%s4] sm:$0x1]
  %v79 = vlaneseq
  %v80 = vshrl.u32 %v79, 7
  %v81 = vsub.s32 0, %v80
  %v82 = vrot.slane %v75, %v81
  %84 = vbcast.lane.b32.xlu0 %v82, 256
  %v85 = vpop.permute.xlu0 %84
  %v86 = vlaneseq
  %v87 = vshrl.u32 %v86, 7
  %v88 = vsub.s32 0, %v87
  %v89 = vrot.slane %v76, %v88
  %91 = vbcast.lane.b32.xlu0 %v89, 256
  %v92 = vpop.permute.xlu0 %91
  %v93 = vmul.f32 %v85, %v77
  %v94 = vmul.f32 %v92, %v77
  %v95 = vsel %vm52, %v93, 0.0
  %v96 = vrot.slane %v95, 4
  %v97 = vadd.f32 %v95, %v96
  %v98 = vrot.slane %v97, 2
  %v99 = vadd.f32 %v97, %v98
  %v100 = vrot.slane %v99, 1
  %v101 = vadd.f32 %v99, %v100
  %v102 = vsel %vm52, %v94, 0.0
  %v103 = vrot.slane %v102, 4
  %v104 = vadd.f32 %v102, %v103
  %v105 = vrot.slane %v104, 2
  %v106 = vadd.f32 %v104, %v105
  %v107 = vrot.slane %v106, 1
  %v108 = vadd.f32 %v106, %v107
  %v110 = vlaneseq
  %v111 = vshrl.u32 %v110, 7
  %v112 = vsub.s32 0, %v111
  %v113 = vrot.slane %v78, %v112
  %v115 = vadd.f32 %v101, %v113
  %v116 = vadd.f32 %v108, %v113
  %v117 = vxor.u32 %v115, 2147483648
  %v118 = vxor.u32 %v116, 2147483648
  %v119 = vmul.f32 %v117, 1.442695
  %v120 = vpow.pop %v119
  %v121 = vmul.f32 %v118, 1.442695
  %v122 = vpow.pop %v121
  %v123 = vadd.f32 %v120, 1.0
  %v124 = vadd.f32 %v122, 1.0
  %v125 = vrcp.pop %v123
  %v126 = vmul.f32 1.0, %v125
  %v127 = vrcp.pop %v124
  %v128 = vmul.f32 1.0, %v127
  %v129 = vld [vmem:[%s5] sm:$0x1]
  %v131 = vlaneseq
  %v132 = vshrl.u32 %v131, 7
  %v133 = vsub.s32 0, %v132
  %v134 = vrot.slane %v129, %v133
  %v136 = vmul.f32 %v126, %v134
  %v137 = vmul.f32 %v128, %v134
  %v138 = vlaneseq
  %v139 = vshrl.u32 %v138, 7
  %v140 = vsub.s32 0, %v139
  %v141 = vrot.slane %v136, %v140
  %143 = vbcast.lane.b32.xlu0 %v141, 256
  %v144 = vpop.permute.xlu0 %143
  %v145 = vlaneseq
  %v146 = vshrl.u32 %v145, 7
  %v147 = vsub.s32 0, %v146
  %v148 = vrot.slane %v137, %v147
  %150 = vbcast.lane.b32.xlu0 %v148, 256
  %v151 = vpop.permute.xlu0 %150
  %v152 = vmul.f32 %v144, %v27
  %v153 = vmul.f32 %v144, %v31
  %v154 = vmul.f32 %v151, %v28
  %v155 = vmul.f32 %v151, %v32
  %v156 = vsel %vm35, %v152, 0.0
  %v157 = vrot.slane %v156, 4
  %v158 = vadd.f32 %v156, %v157
  %v159 = vrot.slane %v158, 2
  %v160 = vadd.f32 %v158, %v159
  %v161 = vrot.slane %v160, 1
  %v162 = vadd.f32 %v160, %v161
  %v163 = vsel %vm35, %v153, 0.0
  %v164 = vrot.slane %v163, 4
  %v165 = vadd.f32 %v163, %v164
  %v166 = vrot.slane %v165, 2
  %v167 = vadd.f32 %v165, %v166
  %v168 = vrot.slane %v167, 1
  %v169 = vadd.f32 %v167, %v168
  %v170 = vsel %vm35, %v154, 0.0
  %v171 = vrot.slane %v170, 4
  %v172 = vadd.f32 %v170, %v171
  %v173 = vrot.slane %v172, 2
  %v174 = vadd.f32 %v172, %v173
  %v175 = vrot.slane %v174, 1
  %v176 = vadd.f32 %v174, %v175
  %v177 = vsel %vm35, %v155, 0.0
  %v178 = vrot.slane %v177, 4
  %v179 = vadd.f32 %v177, %v178
  %v180 = vrot.slane %v179, 2
  %v181 = vadd.f32 %v179, %v180
  %v182 = vrot.slane %v181, 1
  %v183 = vadd.f32 %v181, %v182
  %v184 = vadd.f32 %v162, 0.0
  %v185 = vadd.f32 %v169, 0.0
  %v186 = vadd.f32 %v176, 0.0
  %v187 = vadd.f32 %v183, 0.0
  %s188 = sld [smem:[#allocation2]]
  %v189 = vstv %s188
  %v190 = vadd.f32 %v184, %v189
  %v191 = vadd.f32 %v185, %v189
  %v192 = vadd.f32 %v186, %v189
  %v193 = vadd.f32 %v187, %v189
  %v198 = vcombine.low %v190, %v191
  %v200 = vunpack.c.l.s4 1983009808
  %v201 = vunpack.c.0.s8 %v200
  %v202 = vlaneseq
  %v203 = vshrl.u32 %v202, 7
  %v204 = vsub.s32 %v201, %v203
  %v205 = vrot.slane %v198, %v204
  %v206 = vcombine.low %v192, %v193
  %v208 = vunpack.c.l.s4 1983009808
  %v209 = vunpack.c.0.s8 %v208
  %v210 = vlaneseq
  %v211 = vshrl.u32 %v210, 7
  %v212 = vsub.s32 %v209, %v211
  %v213 = vrot.slane %v206, %v212
  %vm214 = vcmask 1044484
  %v215 = vsel %vm214, %v205, %v205
  %vm216 = vcmask 1046534
  %v217 = vsel %vm216, %v205, %v215
  %v218 = vrot.slane %v213, 7
  %vm219 = vcmask 1041409
  %v220 = vsel %vm219, %v218, %v217
  %vm221 = vcmask 1043459
  %v222 = vsel %vm221, %v218, %v220
  %vm223 = vcmask 1045509
  %v224 = vsel %vm223, %v218, %v222
  %vm225 = vcmask 1047559
  %v226 = vsel %vm225, %v218, %v224
  %228 = vst [vmem:[%s7] sm:$0xf] %v226
  // Predicated region
  $region30: #{se_block_pallas.1} parent=0 // pred_check
    _
  $region31: #{se_block_pallas.1} parent=0 // pred_check_branch
    %230 = sbr.rel (0) target = $region33
  $region32: #{se_block_pallas.1} parent=0 // pred_region
    _
  $region33: #{se_block_pallas.1} parent=0 // pred_fallthru
    _
  // Predicated region
  $region34: #{se_block_pallas.1} parent=0 // pred_check
    _
  $region35: #{se_block_pallas.1} parent=0 // pred_check_branch
    %232 = sbr.rel (0) target = $region37
  $region36: #{se_block_pallas.1} parent=0 // pred_region
    _
  $region37: #{se_block_pallas.1} parent=0 // pred_fallthru
    _

</llo_original>
